<compile_context>
chip_gen: v5e
topology: v5e:2x2
jax: 0.10.0
libtpu: 0.0.40
codegen_flags: <defaults>
</compile_context>

<pallas_src>
import functools

import jax
import jax.numpy as jnp
from jax import lax
from jax.experimental import pallas as pl
from jax.experimental.pallas import tpu as pltpu


def _round_up(x, n):
    return ((x + n - 1) // n) * n


def _add_margin_kernel(x_ref, wt_ref, inv_xn_ref, label_ref, out_ref, *, s, m, eps, to):
    # x_ref:      (TB, INp)  streamed dtype; grid-resident when TB == Bp
    # wt_ref:     (INp, TO)  streamed dtype, pre-transposed weight tile
    # inv_xn_ref: (TB, 1)    f32, 1 / max(||x_i||, eps)
    # label_ref:  (TB, 1)    i32, -1 => no margin for that row
    # out_ref:    (TB, TO)   f32
    x = x_ref[...]
    wt = wt_ref[...]

    # Per-class inverse norms from the resident weight tile: one cross-sublane
    # XLU reduce per OUT tile (hides under the MXU); avoids a second full HBM
    # pass over the weight in the wrapper.  Always f32.
    w_ss = jnp.sum(jnp.square(wt.astype(jnp.float32)), axis=0, keepdims=True)   # (1, TO)
    inv_wn = 1.0 / jnp.maximum(jnp.sqrt(w_ss), jnp.float32(eps))

    # (TB, INp) x (INp, TO) -> (TB, TO) on the MXU with f32 accumulation.
    dot = lax.dot_general(
        x, wt,
        dimension_numbers=(((1,), (0,)), ((), ())),
        preferred_element_type=jnp.float32,
    )

    # Fold both normalizations and the scale s into the epilogue (all f32).
    cosine_s = dot * (inv_xn_ref[...] * jnp.float32(s)) * inv_wn

    # Margin: subtract s*m at the (global) label column.  Local label < 0 or
    # >= TO (including label == -1) never matches the iota -> no extra guard.
    lab_local = label_ref[...] - pl.program_id(0) * to                            # (TB, 1)
    col = lax.broadcasted_iota(jnp.int32, cosine_s.shape, 1)
    out = cosine_s - jnp.where(col == lab_local, jnp.float32(s * m), jnp.float32(0.0))

    out_ref[...] = out.astype(out_ref.dtype)


def _pick_tiles(B, OUT, INp, dsize, vmem_budget):
    """Largest (tb, to) fitting the VMEM budget.  tb covers the whole batch
    when possible so x / labels / inv-norms stay grid-resident."""
    tb = min(_round_up(B, 8), 1024)
    to = min(1024, _round_up(OUT, 128))

    def usage(tb_, to_):
        # double-buffered streamed inputs + double-buffered f32 output tile
        # + tiny (TB, 1) side inputs.
        return (2 * dsize * (tb_ * INp + INp * to_)
                + 2 * 4 * tb_ * to_
                + 4 * 4 * tb_)

    while to > 128 and usage(tb, to) > vmem_budget:
        to -= 128
    while tb > 8 and usage(tb, to) > vmem_budget:
        tb = max(8, _round_up(tb // 2, 8))
    return tb, to


def add_margin_product(x, weight, label, *, s=64.0, m=0.35, eps=1e-12,
                       vmem_budget=40 << 20):
    """Pallas-backed AddMarginProduct forward.

    x:      (B, in_features)             f32 or bf16
    weight: (out_features, in_features)  same dtype as x (cast otherwise)
    label:  (B,) int32, -1 means skip margin for that row
    """
    B, IN = x.shape
    OUT, IN2 = weight.shape
    assert IN == IN2

    if weight.dtype != x.dtype:
        weight = weight.astype(x.dtype)
    dsize = jnp.dtype(x.dtype).itemsize

    INp = _round_up(IN, 128)                     # lane-dense loads, full MXU depth
    tb, to = _pick_tiles(B, OUT, INp, dsize, vmem_budget)
    Bp = _round_up(B, tb)
    OUTp = _round_up(OUT, to)

    # With B in a single tile all megacore parallelism comes from the OUT axis:
    # split it into >= 2 tiles when possible (v7x has 2 TensorCores per chip).
    if Bp // tb == 1 and OUTp // to == 1 and to > 128:
        to = _round_up(-(-to // 2), 128)
        OUTp = _round_up(OUT, to)

    # Zero-pad features / classes / batch.  Zero feature columns change neither
    # the dots nor the norms; padded rows/classes are sliced away at the end.
    x_p = jnp.pad(x, ((0, Bp - B), (0, INp - IN)))
    w_p = jnp.pad(weight, ((0, OUTp - OUT), (0, INp - IN)))
    w_t = jnp.transpose(w_p)                                      # (INp, OUTp), one-time
    lab_p = jnp.pad(label.astype(jnp.int32).reshape(B, 1),
                    ((0, Bp - B), (0, 0)), constant_values=-1)

    # Per-row inverse norms once in the wrapper (tiny (Bp, 1) side input) so the
    # kernel never re-reduces x per OUT tile.  f32 regardless of streamed dtype.
    xf = x_p.astype(jnp.float32)
    inv_xn = 1.0 / jnp.maximum(
        jnp.sqrt(jnp.sum(xf * xf, axis=1, keepdims=True)), jnp.float32(eps))

    grid = (OUTp // to, Bp // tb)     # OUT outer, B inner -> weight tile reused over b
    n_b = grid[1]

    kernel = functools.partial(
        _add_margin_kernel, s=float(s), m=float(m), eps=float(eps), to=to)

    cost = pl.CostEstimate(
        flops=2 * Bp * OUTp * INp,
        transcendentals=0,
        bytes_accessed=(dsize * (INp * OUTp                                   # weight read once
                                 + Bp * INp * (1 if n_b == 1 else grid[0]))   # x re-streamed only if B is tiled
                        + 4 * (Bp * OUTp + 2 * Bp)),                          # output + side inputs
    )

    out_p = pl.pallas_call(
        kernel,
        out_shape=jax.ShapeDtypeStruct((Bp, OUTp), jnp.float32),
        grid_spec=pltpu.PrefetchScalarGridSpec(
            num_scalar_prefetch=0,
            grid=grid,
            in_specs=[
                pl.BlockSpec((tb, INp), lambda o, b: (b, 0)),    # x (grid-resident if n_b == 1)
                pl.BlockSpec((INp, to), lambda o, b: (0, o)),    # weight tile (K, N), reused over b
                pl.BlockSpec((tb, 1), lambda o, b: (b, 0)),      # 1 / ||x||
                pl.BlockSpec((tb, 1), lambda o, b: (b, 0)),      # labels
            ],
            out_specs=pl.BlockSpec((tb, to), lambda o, b: (b, o)),
        ),
        compiler_params=pltpu.CompilerParams(
            dimension_semantics=("parallel", "parallel"),
            vmem_limit_bytes=48 << 20,   # above v5e's 16 MiB default, under v7x's 64 MiB physical
        ),
        cost_estimate=cost,
    )(x_p, w_t, inv_xn, lab_p)

    return out_p[:B, :OUT]


def _reference(x, weight, label, s=64.0, m=0.35, eps=1e-12):
    x_n = x / jnp.maximum(jnp.linalg.norm(x, axis=1, keepdims=True), eps)
    w_n = weight / jnp.maximum(jnp.linalg.norm(weight, axis=1, keepdims=True), eps)
    cosine = jnp.dot(x_n, w_n.T, precision=lax.Precision.HIGHEST)
    col = jnp.arange(cosine.shape[1])[None, :]
    hit = (label[:, None] != -1) & (col == label[:, None])
    cosine = cosine - jnp.where(hit, m, 0.0)
    return cosine * s


if __name__ == "__main__":
    key = jax.random.PRNGKey(0)
    k_x, k_w, k_l = jax.random.split(key, 3)

    # Small but non-trivial shapes: IN=64 exercises feature padding (->128),
    # OUT=300 exercises class padding and produces 2 OUT tiles.
    B, IN, OUT = 16, 64, 300
    s_val, m_val = 64.0, 0.35

    x = jax.random.normal(k_x, (B, IN), dtype=jnp.float32)
    # Mirrors torch.nn.init.normal_(mean=0.0, std=0.01).
    weight = 0.01 * jax.random.normal(k_w, (OUT, IN), dtype=jnp.float32)
    # Labels in [0, OUT); mark a couple of rows as -1 (no margin applied).
    label = jax.random.randint(k_l, (B,), 0, OUT, dtype=jnp.int32)
    label = label.at[1].set(-1).at[5].set(-1)

    out = add_margin_product(x, weight, label, s=s_val, m=m_val)
    out = jax.block_until_ready(out)

    ref = _reference(x, weight, label, s=s_val, m=m_val)
    assert out.shape == (B, OUT)
    assert jnp.allclose(out, ref, atol=1e-3, rtol=1e-3), "mismatch vs reference"

    print("KERNEL_OK")
</pallas_src>

<mosaic_0001>
module attributes {stable_mosaic.version = 11 : i64} {
  func.func @_add_margin_kernel(%arg0: i32, %arg1: i32, %arg2: memref<16x128xf32, #tpu.memory_space<vmem>>, %arg3: memref<128x256xf32, #tpu.memory_space<vmem>>, %arg4: memref<16x1xf32, #tpu.memory_space<vmem>>, %arg5: memref<16x1xi32, #tpu.memory_space<vmem>>, %arg6: memref<16x256xf32, #tpu.memory_space<vmem>>) attributes {dimension_semantics = [#tpu.dimension_semantics<parallel>, #tpu.dimension_semantics<parallel>], iteration_bounds = array<i64: 2, 1>, scalar_prefetch = 0 : i64, scratch_operands = 0 : i64, tpu.core_type = #tpu.core_type<tc>, window_params = [{transform_indices = @transform_0, window_bounds = array<i64: 16, 128>}, {transform_indices = @transform_1, window_bounds = array<i64: 128, 256>}, {transform_indices = @transform_2, window_bounds = array<i64: 16, 1>}, {transform_indices = @transform_3, window_bounds = array<i64: 16, 1>}, {transform_indices = @transform_4, window_bounds = array<i64: 16, 256>}]} {
    %c0 = arith.constant 0 : index
    %c0_0 = arith.constant 0 : index
    %0 = vector.load %arg2[%c0, %c0_0] : memref<16x128xf32, #tpu.memory_space<vmem>>, vector<16x128xf32>
    %c0_1 = arith.constant 0 : index
    %c0_2 = arith.constant 0 : index
    %1 = vector.load %arg3[%c0_1, %c0_2] : memref<128x256xf32, #tpu.memory_space<vmem>>, vector<128x256xf32>
    %2 = arith.mulf %1, %1 : vector<128x256xf32>
    %cst = arith.constant dense<0.000000e+00> : vector<256xf32>
    %3 = vector.multi_reduction <add>, %2, %cst [0] : vector<128x256xf32> to vector<256xf32>
    %4 = vector.shape_cast %3 : vector<256xf32> to vector<1x256xf32>
    %5 = math.sqrt %4 : vector<1x256xf32>
    %cst_3 = arith.constant 9.99999996E-13 : f32
    %6 = vector.broadcast %cst_3 : f32 to vector<1x256xf32>
    %7 = arith.maximumf %5, %6 : vector<1x256xf32>
    %cst_4 = arith.constant 1.000000e+00 : f32
    %8 = vector.broadcast %cst_4 : f32 to vector<1x256xf32>
    %9 = arith.divf %8, %7 : vector<1x256xf32>
    %cst_5 = arith.constant dense<0.000000e+00> : vector<16x256xf32>
    %10 = tpu.matmul %0, %1, %cst_5 {dimension_numbers = #tpu.dot_dimension_numbers<[1], [0], [0], [1], [0, 0, 1, 1], [], []>} : vector<16x128xf32>, vector<128x256xf32>, vector<16x256xf32> -> vector<16x256xf32>
    %c0_6 = arith.constant 0 : index
    %c0_7 = arith.constant 0 : index
    %11 = vector.load %arg4[%c0_6, %c0_7] : memref<16x1xf32, #tpu.memory_space<vmem>>, vector<16x1xf32>
    %cst_8 = arith.constant 6.400000e+01 : f32
    %12 = vector.broadcast %cst_8 : f32 to vector<16x1xf32>
    %13 = arith.mulf %11, %12 : vector<16x1xf32>
    %14 = vector.broadcast %13 : vector<16x1xf32> to vector<16x256xf32>
    %15 = arith.mulf %10, %14 : vector<16x256xf32>
    %16 = vector.broadcast %9 : vector<1x256xf32> to vector<16x256xf32>
    %17 = arith.mulf %15, %16 : vector<16x256xf32>
    %c0_9 = arith.constant 0 : index
    %c0_10 = arith.constant 0 : index
    %18 = vector.load %arg5[%c0_9, %c0_10] : memref<16x1xi32, #tpu.memory_space<vmem>>, vector<16x1xi32>
    %c256_i32 = arith.constant 256 : i32
    %19 = arith.muli %arg0, %c256_i32 : i32
    %20 = vector.broadcast %19 : i32 to vector<16x1xi32>
    %21 = arith.subi %18, %20 : vector<16x1xi32>
    %22 = tpu.iota {dimensions = array<i32: 1>} : vector<16x256xi32>
    %23 = vector.broadcast %21 : vector<16x1xi32> to vector<16x256xi32>
    %24 = arith.cmpi eq, %22, %23 : vector<16x256xi32>
    %cst_11 = arith.constant 2.240000e+01 : f32
    %cst_12 = arith.constant 0.000000e+00 : f32
    %25 = vector.broadcast %cst_11 : f32 to vector<16x256xf32>
    %26 = vector.broadcast %cst_12 : f32 to vector<16x256xf32>
    %27 = arith.select %24, %25, %26 : vector<16x256xi1>, vector<16x256xf32>
    %28 = arith.subf %17, %27 : vector<16x256xf32>
    %c0_13 = arith.constant 0 : index
    %c0_14 = arith.constant 0 : index
    %29 = vector.load %arg6[%c0_13, %c0_14] : memref<16x256xf32, #tpu.memory_space<vmem>>, vector<16x256xf32>
    tpu.vector_store %arg6[%c0_13, %c0_14], %28 {strides = array<i32>} : memref<16x256xf32, #tpu.memory_space<vmem>>, vector<16x256xf32>,
    return
  }
  func.func @transform_0(%arg0: i32, %arg1: i32) -> (i32, i32) {
    %c0_i32 = arith.constant 0 : i32
    %c0_i32_0 = arith.constant 0 : i32
    return %arg1, %c0_i32 : i32, i32
  }
  func.func @transform_1(%arg0: i32, %arg1: i32) -> (i32, i32) {
    %c0_i32 = arith.constant 0 : i32
    %c0_i32_0 = arith.constant 0 : i32
    return %c0_i32, %arg0 : i32, i32
  }
  func.func @transform_2(%arg0: i32, %arg1: i32) -> (i32, i32) {
    %c0_i32 = arith.constant 0 : i32
    %c0_i32_0 = arith.constant 0 : i32
    return %arg1, %c0_i32 : i32, i32
  }
  func.func @transform_3(%arg0: i32, %arg1: i32) -> (i32, i32) {
    %c0_i32 = arith.constant 0 : i32
    %c0_i32_0 = arith.constant 0 : i32
    return %arg1, %c0_i32 : i32, i32
  }
  func.func @transform_4(%arg0: i32, %arg1: i32) -> (i32, i32) {
    %c0_i32 = arith.constant 0 : i32
    return %arg1, %arg0 : i32, i32
  }
}

</mosaic_0001>

<llo_original>
// kernel: tpu_custom_call.1
$region0: #{tpu_custom_call.1}
  #allocation0 [shape = 'u32[]', space=smem, size = 0x4, offset = 0x4, fixed_abs, tag = 'smem constant byte address 0x4 - core index']
  #allocation1 [shape = 'u32[72,128]{1,0:T(1,128)}', space=vmem, size = 0x9000, scoped, tag = 'internal scratch']
  %s0 = inlined_call_operand.vmem [shape: f32[16,128], index: 0, kind: input, shape index: {}]
  %s1 = inlined_call_operand.hbm [shape: f32[128,512], index: 1, kind: input, shape index: {}]
  %s2 = inlined_call_operand.vmem [shape: f32[16,1], index: 2, kind: input, shape index: {}]
  %s3 = inlined_call_operand.vmem [shape: s32[16,1], index: 3, kind: input, shape index: {}]
  %s4 = inlined_call_operand.hbm [shape: f32[16,512], index: 4, kind: output, shape index: {}]
  %s5 = sld [smem:[#allocation0]]
  $region53: #{tpu_custom_call.1} parent=0
    _
  %s7 = ssub.s32 1, %s5
  %s8 = scalar_select 0, %s7, %s5
  $region1: #{tpu_custom_call.1} parent=0
    #allocation2 [shape = 'u8[262144]{0}', space=vmem, size = 0x40000, scoped, tag = 'input window, operand 1']
    #allocation3 [shape = 's32[2]{0}', space=sflag, size = 0x8, scoped, tag = 'scoped memory for tpu_custom_call.1']
    #allocation4 [shape = 's32[2]{0}', space=sflag, size = 0x8, scoped, tag = 'scoped memory for tpu_custom_call.1']
    #allocation5 [shape = 'u8[32768]{0}', space=vmem, size = 0x8000, scoped, tag = 'output window, operand 0']
    %9 = vsyncpa [#allocation3], 0
    %s10 = scalar_lea.sflag [#allocation3], 1
    %11 = vsyncpa %s10, 0
    %12 = vsyncpa [#allocation4], 0
    %s13 = scalar_lea.sflag [#allocation4], 1
    %14 = vsyncpa %s13, 0
    loop: start=0, step=1, limit=4
    $region2: #{tpu_custom_call.1} parent=1 // loop_pre_header
      _
    $region3: #{tpu_custom_call.1} parent=1 // loop_header
      %s16 = sphi 0, %s20
      %p17 = scmp.ge.s32.totalorder %s16, 4
      %s23 = sphi 0, %s35
      %s24 = sphi 0, %s31
      %s25 = sphi 0, %s23
      %s26 = sphi 0, %s24
      %s27 = sphi 0, %s25
      %s28 = sphi 0, %s26
      %s38 = sphi 0, %s40
      %s41 = sphi 0, %s38
      %s42 = sphi 0, %s41
      %s58 = sphi 0, %s42
      %s64 = sphi 0, %s66
      %s67 = sphi 0, %s64
      %s68 = sphi 0, %s67
      %s84 = sphi 0, %s68
      %s90 = sphi 0, %s92
      %s93 = sphi 0, %s90
      %s94 = sphi 0, %s93
      %s110 = sphi 0, %s94
      %s116 = sphi 0, %s118
      %s119 = sphi 0, %s116
      %s120 = sphi 0, %s119
      %s136 = sphi 0, %s120
      %s144 = sphi 0, %s146
      %s147 = sphi 0, %s144
      %s148 = sphi 0, %s147
      %s164 = sphi 0, %s148
    $region4: #{tpu_custom_call.1} parent=1 // loop_header_branch
      %19 = sbr.rel (%p17) target = $region8
    $region5: #{tpu_custom_call.1} parent=1 // loop_body
      %s21 = ssub.s32 %s16, 1
      %s22 = ssub.s32 %s16, 2
      %s29 = sadd.s32 1, %s24
      %p30 = scmp.ge.s32.totalorder %s29, 1
      %s31 = scalar_select %p30, 0, %s29
      %s32 = sadd.s32 1, %s23
      %s33 = scalar_select %p30, %s32, %s23
      %p34 = scmp.ge.s32.totalorder %s33, 2
      %s35 = scalar_select %p34, 0, %s33
      %s36 = ssub.s32 %s24, %s31
      %p37 = scmp.eq.s32.totalorder %s36, 0
      %s39 = sadd.s32 %s38, 1
      %s40 = scalar_select %p37, %s38, %s39
      %p43 = pneg %p37
      %p44 = scmp.eq.s32.totalorder %s16, 1
      %p45 = por %p43, %p44
      %p46 = scmp.ne.s32.totalorder %s38, %s41
      %p47 = scmp.eq.s32.totalorder %s16, 0
      %p48 = por %p46, %p47
      %p49 = scmp.ne.s32.totalorder %s38, %s41
      %p50 = scmp.eq.s32.totalorder %s21, 1
      %p51 = por %p49, %p50
      %p52 = scmp.ne.s32.totalorder %s41, %s42
      %p53 = scmp.eq.s32.totalorder %s21, 0
      %p54 = por %p52, %p53
      %p55 = scmp.ne.s32.totalorder %s41, %s42
      %p56 = scmp.eq.s32.totalorder %s22, 1
      %p57 = por %p55, %p56
      %p59 = scmp.ne.s32.totalorder %s42, %s58
      %p60 = scmp.eq.s32.totalorder %s22, 0
      %p61 = por %p59, %p60
      %s62 = ssub.s32 %s23, %s35
      %p63 = scmp.eq.s32.totalorder %s62, 0
      %s65 = sadd.s32 %s64, 1
      %s66 = scalar_select %p63, %s64, %s65
      %p69 = pneg %p63
      %p70 = scmp.eq.s32.totalorder %s16, 1
      %p71 = por %p69, %p70
      %p72 = scmp.ne.s32.totalorder %s64, %s67
      %p73 = scmp.eq.s32.totalorder %s16, 0
      %p74 = por %p72, %p73
      %p75 = scmp.ne.s32.totalorder %s64, %s67
      %p76 = scmp.eq.s32.totalorder %s21, 1
      %p77 = por %p75, %p76
      %p78 = scmp.ne.s32.totalorder %s67, %s68
      %p79 = scmp.eq.s32.totalorder %s21, 0
      %p80 = por %p78, %p79
      %p81 = scmp.ne.s32.totalorder %s67, %s68
      %p82 = scmp.eq.s32.totalorder %s22, 1
      %p83 = por %p81, %p82
      %p85 = scmp.ne.s32.totalorder %s68, %s84
      %p86 = scmp.eq.s32.totalorder %s22, 0
      %p87 = por %p85, %p86
      %s88 = ssub.s32 %s24, %s31
      %p89 = scmp.eq.s32.totalorder %s88, 0
      %s91 = sadd.s32 %s90, 1
      %s92 = scalar_select %p89, %s90, %s91
      %p95 = pneg %p89
      %p96 = scmp.eq.s32.totalorder %s16, 1
      %p97 = por %p95, %p96
      %p98 = scmp.ne.s32.totalorder %s90, %s93
      %p99 = scmp.eq.s32.totalorder %s16, 0
      %p100 = por %p98, %p99
      %p101 = scmp.ne.s32.totalorder %s90, %s93
      %p102 = scmp.eq.s32.totalorder %s21, 1
      %p103 = por %p101, %p102
      %p104 = scmp.ne.s32.totalorder %s93, %s94
      %p105 = scmp.eq.s32.totalorder %s21, 0
      %p106 = por %p104, %p105
      %p107 = scmp.ne.s32.totalorder %s93, %s94
      %p108 = scmp.eq.s32.totalorder %s22, 1
      %p109 = por %p107, %p108
      %p111 = scmp.ne.s32.totalorder %s94, %s110
      %p112 = scmp.eq.s32.totalorder %s22, 0
      %p113 = por %p111, %p112
      %s114 = ssub.s32 %s24, %s31
      %p115 = scmp.eq.s32.totalorder %s114, 0
      %s117 = sadd.s32 %s116, 1
      %s118 = scalar_select %p115, %s116, %s117
      %p121 = pneg %p115
      %p122 = scmp.eq.s32.totalorder %s16, 1
      %p123 = por %p121, %p122
      %p124 = scmp.ne.s32.totalorder %s116, %s119
      %p125 = scmp.eq.s32.totalorder %s16, 0
      %p126 = por %p124, %p125
      %p127 = scmp.ne.s32.totalorder %s116, %s119
      %p128 = scmp.eq.s32.totalorder %s21, 1
      %p129 = por %p127, %p128
      %p130 = scmp.ne.s32.totalorder %s119, %s120
      %p131 = scmp.eq.s32.totalorder %s21, 0
      %p132 = por %p130, %p131
      %p133 = scmp.ne.s32.totalorder %s119, %s120
      %p134 = scmp.eq.s32.totalorder %s22, 1
      %p135 = por %p133, %p134
      %p137 = scmp.ne.s32.totalorder %s120, %s136
      %p138 = scmp.eq.s32.totalorder %s22, 0
      %p139 = por %p137, %p138
      %s140 = ssub.s32 %s24, %s31
      %s141 = ssub.s32 %s23, %s35
      %s142 = sor.u32 %s140, %s141
      %p143 = scmp.eq.s32.totalorder %s142, 0
      %s145 = sadd.s32 %s144, 1
      %s146 = scalar_select %p143, %s144, %s145
      %p149 = pneg %p143
      %p150 = scmp.eq.s32.totalorder %s16, 1
      %p151 = por %p149, %p150
      %p152 = scmp.ne.s32.totalorder %s144, %s147
      %p153 = scmp.eq.s32.totalorder %s16, 0
      %p154 = por %p152, %p153
      %p155 = scmp.ne.s32.totalorder %s144, %s147
      %p156 = scmp.eq.s32.totalorder %s21, 1
      %p157 = por %p155, %p156
      %p158 = scmp.ne.s32.totalorder %s147, %s148
      %p159 = scmp.eq.s32.totalorder %s21, 0
      %p160 = por %p158, %p159
      %p161 = scmp.ne.s32.totalorder %s147, %s148
      %p162 = scmp.eq.s32.totalorder %s22, 1
      %p163 = por %p161, %p162
      %p165 = scmp.ne.s32.totalorder %s148, %s164
      %p166 = scmp.eq.s32.totalorder %s22, 0
      %p167 = por %p165, %p166
      %p168 = scmp.le.s32.totalorder 1, %s16
      %p169 = scmp.lt.s32.totalorder %s16, 3
      %p170 = pnand %p168, %p169
      %p171 = pneg %p170
      // Predicated region
      $region9: #{tpu_custom_call.1} parent=5 // pred_check
        _
      $region10: #{tpu_custom_call.1} parent=5 // pred_check_branch
        %173 = sbr.rel (%p170) target = $region12
      $region11: #{tpu_custom_call.1} parent=5 // pred_region
        %s174 = ssub.s32 %s16, 1
        // Predicated region
        $region13: #{tpu_custom_call.1} parent=11 // pred_check
          %p175 = pneg %p54
        $region14: #{tpu_custom_call.1} parent=11 // pred_check_branch
          %177 = sbr.rel (%p175) target = $region16
        $region15: #{tpu_custom_call.1} parent=11 // pred_region
          %s178 = smul.u32 2, %s26
          %p179 = scmp.lt.s32.totalorder %s178, 1
          %s180 = scalar_select %p179, %s178, 1
          %s181 = smul.addr %s180, 8
          %s182 = scalar_lea.vmem %s0, %s181
          %s183 = smul.u32 2, %s26
        $region16: #{tpu_custom_call.1} parent=11 // pred_fallthru
          _
        // Predicated region
        $region17: #{tpu_custom_call.1} parent=11 // pred_check
          %p184 = pneg %p106
        $region18: #{tpu_custom_call.1} parent=11 // pred_check_branch
          %186 = sbr.rel (%p184) target = $region20
        $region19: #{tpu_custom_call.1} parent=11 // pred_region
          %s187 = smul.u32 2, %s26
          %p188 = scmp.lt.s32.totalorder %s187, 1
          %s189 = scalar_select %p188, %s187, 1
          %s190 = smul.addr %s189, 8
          %s191 = scalar_lea.vmem %s2, %s190
          %s192 = smul.u32 2, %s26
        $region20: #{tpu_custom_call.1} parent=11 // pred_fallthru
          _
        // Predicated region
        $region21: #{tpu_custom_call.1} parent=11 // pred_check
          %p193 = pneg %p132
        $region22: #{tpu_custom_call.1} parent=11 // pred_check_branch
          %195 = sbr.rel (%p193) target = $region24
        $region23: #{tpu_custom_call.1} parent=11 // pred_region
          %s196 = smul.u32 2, %s26
          %p197 = scmp.lt.s32.totalorder %s196, 1
          %s198 = scalar_select %p197, %s196, 1
          %s199 = smul.addr %s198, 8
          %s200 = scalar_lea.vmem %s3, %s199
          %s201 = smul.u32 2, %s26
        $region24: #{tpu_custom_call.1} parent=11 // pred_fallthru
          _
      $region12: #{tpu_custom_call.1} parent=5 // pred_fallthru
        _
      %p202 = scmp.lt.s32.totalorder %s16, 2
      // Predicated region
      $region25: #{tpu_custom_call.1} parent=5 // pred_check
        %p203 = pneg %p202
      $region26: #{tpu_custom_call.1} parent=5 // pred_check_branch
        %205 = sbr.rel (%p203) target = $region28
      $region27: #{tpu_custom_call.1} parent=5 // pred_region
        // Predicated region
        $region29: #{tpu_custom_call.1} parent=27 // pred_check
          %p206 = pneg %p74
        $region30: #{tpu_custom_call.1} parent=27 // pred_check_branch
          %208 = sbr.rel (%p206) target = $region32
        $region31: #{tpu_custom_call.1} parent=27 // pred_region
          %s209 = sand.u32 %s64, 1
          %s210 = scalar_lea.sflag [#allocation3], %s209
          %s211 = sand.u32 %s64, 1
          %s212 = smul.addr %s211, 256
          %s213 = scalar_lea.vmem [#allocation2], %s212
          %s214 = smul.u32 2, %s23
          %216 = vsyncadd %s210, 0
          %s217 = smul.addr %s214, 8
          %s218 = scalar_lea.hbm %s1, %s217
          %s219 = sshll.u32 %s218, 4
          %s220 = int_to_ptr.hbm [resolvable:$true] %s219
          %s221 = sshll.u32 %s213, 4
          %s222 = int_to_ptr.vmem [resolvable:$true] %s221
          %227 = dma.hbm_to_vmem [thread:$0]  %s220, 4096, %s222, %s210, 512, 256, 16
        $region32: #{tpu_custom_call.1} parent=27 // pred_fallthru
          _
      $region28: #{tpu_custom_call.1} parent=5 // pred_fallthru
        _
      %p228 = scmp.le.s32.totalorder 1, %s16
      %p229 = scmp.lt.s32.totalorder %s16, 3
      %p230 = pnand %p228, %p229
      %p231 = pneg %p230
      // Predicated region
      $region33: #{tpu_custom_call.1} parent=5 // pred_check
        _
      $region34: #{tpu_custom_call.1} parent=5 // pred_check_branch
        %233 = sbr.rel (%p230) target = $region36
      $region35: #{tpu_custom_call.1} parent=5 // pred_region
        %s234 = ssub.s32 %s16, 1
        %s235 = sand.u32 %s67, 1
        %s236 = scalar_lea.sflag [#allocation3], %s235
        %s237 = sand.u32 %s67, 1
        %s238 = smul.addr %s237, 256
        %s239 = scalar_lea.vmem [#allocation2], %s238
        // Predicated region
        $region37: #{tpu_custom_call.1} parent=35 // pred_check
          %p240 = pneg %p80
        $region38: #{tpu_custom_call.1} parent=35 // pred_check_branch
          %242 = sbr.rel (%p240) target = $region40
        $region39: #{tpu_custom_call.1} parent=35 // pred_region
          %244 = dma.done %s236, 4096
        $region40: #{tpu_custom_call.1} parent=35 // pred_fallthru
          _
        %s245 = smul.u32 2, %s26
        %p246 = scmp.lt.s32.totalorder %s245, 1
        %s247 = scalar_select %p246, %s245, 1
        %s248 = smul.addr %s247, 8
        %s249 = scalar_lea.vmem %s0, %s248
        %p250 = pneg %p54
        %p251 = pneg %p51
        %s252 = sand.u32 %s67, 1
        %s253 = scalar_lea.sflag [#allocation3], %s252
        %s254 = sand.u32 %s67, 1
        %s255 = smul.addr %s254, 256
        %s256 = scalar_lea.vmem [#allocation2], %s255
        %p257 = pneg %p80
        %p258 = pneg %p77
        %s259 = smul.u32 2, %s26
        %p260 = scmp.lt.s32.totalorder %s259, 1
        %s261 = scalar_select %p260, %s259, 1
        %s262 = smul.addr %s261, 8
        %s263 = scalar_lea.vmem %s2, %s262
        %p264 = pneg %p106
        %p265 = pneg %p103
        %s266 = smul.u32 2, %s26
        %p267 = scmp.lt.s32.totalorder %s266, 1
        %s268 = scalar_select %p267, %s266, 1
        %s269 = smul.addr %s268, 8
        %s270 = scalar_lea.vmem %s3, %s269
        %p271 = pneg %p132
        %p272 = pneg %p129
        %p273 = pneg %p160
        %p274 = pneg %p157
        %s275 = sand.u32 %s147, 1
        %s276 = scalar_lea.sflag [#allocation4], %s275
        %s277 = sand.u32 %s147, 1
        %s278 = smul.addr %s277, 32
        %s279 = scalar_lea.vmem [#allocation5], %s278
        %s280 = smul.u32 2, %s26
        %p281 = scmp.lt.s32.totalorder %s280, 1
        %s282 = scalar_select %p281, %s280, 1
        %s283 = smul.addr %s282, 8
        %s284 = scalar_lea.vmem %s0, %s283
        %s285 = smul.u32 2, %s26
        %s286 = smul.u32 2, %s25
        %s287 = smul.u32 2, %s26
        %p288 = scmp.lt.s32.totalorder %s287, 1
        %s289 = scalar_select %p288, %s287, 1
        %s290 = smul.addr %s289, 8
        %s291 = scalar_lea.vmem %s2, %s290
        %s292 = smul.u32 2, %s26
        %s293 = smul.u32 2, %s26
        %p294 = scmp.lt.s32.totalorder %s293, 1
        %s295 = scalar_select %p294, %s293, 1
        %s296 = smul.addr %s295, 8
        %s297 = scalar_lea.vmem %s3, %s296
        %s298 = smul.u32 2, %s26
        %s299 = smul.u32 2, %s26
        %s300 = smul.u32 2, %s25
        %v301 = vld [vmem:[%s284] sm:$0xff]
        %v302 = vld [vmem:[%s284 + $0x8] sm:$0xff]
        %v303 = vld [vmem:[%s239] sm:$0xff]
        %v304 = vld [vmem:[%s239 + $0x8] sm:$0xff]
        %v305 = vld [vmem:[%s239 + $0x10] sm:$0xff]
        %v306 = vld [vmem:[%s239 + $0x18] sm:$0xff]
        %v307 = vld [vmem:[%s239 + $0x20] sm:$0xff]
        %v308 = vld [vmem:[%s239 + $0x28] sm:$0xff]
        %v309 = vld [vmem:[%s239 + $0x30] sm:$0xff]
        %v310 = vld [vmem:[%s239 + $0x38] sm:$0xff]
        %v311 = vld [vmem:[%s239 + $0x40] sm:$0xff]
        %v312 = vld [vmem:[%s239 + $0x48] sm:$0xff]
        %v313 = vld [vmem:[%s239 + $0x50] sm:$0xff]
        %v314 = vld [vmem:[%s239 + $0x58] sm:$0xff]
        %v315 = vld [vmem:[%s239 + $0x60] sm:$0xff]
        %v316 = vld [vmem:[%s239 + $0x68] sm:$0xff]
        %v317 = vld [vmem:[%s239 + $0x70] sm:$0xff]
        %v318 = vld [vmem:[%s239 + $0x78] sm:$0xff]
        %v319 = vld [vmem:[%s239 + $0x80] sm:$0xff]
        %v320 = vld [vmem:[%s239 + $0x88] sm:$0xff]
        %v321 = vld [vmem:[%s239 + $0x90] sm:$0xff]
        %v322 = vld [vmem:[%s239 + $0x98] sm:$0xff]
        %v323 = vld [vmem:[%s239 + $0xa0] sm:$0xff]
        %v324 = vld [vmem:[%s239 + $0xa8] sm:$0xff]
        %v325 = vld [vmem:[%s239 + $0xb0] sm:$0xff]
        %v326 = vld [vmem:[%s239 + $0xb8] sm:$0xff]
        %v327 = vld [vmem:[%s239 + $0xc0] sm:$0xff]
        %v328 = vld [vmem:[%s239 + $0xc8] sm:$0xff]
        %v329 = vld [vmem:[%s239 + $0xd0] sm:$0xff]
        %v330 = vld [vmem:[%s239 + $0xd8] sm:$0xff]
        %v331 = vld [vmem:[%s239 + $0xe0] sm:$0xff]
        %v332 = vld [vmem:[%s239 + $0xe8] sm:$0xff]
        %v333 = vld [vmem:[%s239 + $0xf0] sm:$0xff]
        %v334 = vld [vmem:[%s239 + $0xf8] sm:$0xff]
        %v335 = vmul.f32 %v303, %v303
        %v336 = vmul.f32 %v304, %v304
        %v337 = vmul.f32 %v305, %v305
        %v338 = vmul.f32 %v306, %v306
        %v339 = vmul.f32 %v307, %v307
        %v340 = vmul.f32 %v308, %v308
        %v341 = vmul.f32 %v309, %v309
        %v342 = vmul.f32 %v310, %v310
        %v343 = vmul.f32 %v311, %v311
        %v344 = vmul.f32 %v312, %v312
        %v345 = vmul.f32 %v313, %v313
        %v346 = vmul.f32 %v314, %v314
        %v347 = vmul.f32 %v315, %v315
        %v348 = vmul.f32 %v316, %v316
        %v349 = vmul.f32 %v317, %v317
        %v350 = vmul.f32 %v318, %v318
        %v351 = vmul.f32 %v319, %v319
        %v352 = vmul.f32 %v320, %v320
        %v353 = vmul.f32 %v321, %v321
        %v354 = vmul.f32 %v322, %v322
        %v355 = vmul.f32 %v323, %v323
        %v356 = vmul.f32 %v324, %v324
        %v357 = vmul.f32 %v325, %v325
        %v358 = vmul.f32 %v326, %v326
        %v359 = vmul.f32 %v327, %v327
        %v360 = vmul.f32 %v328, %v328
        %v361 = vmul.f32 %v329, %v329
        %v362 = vmul.f32 %v330, %v330
        %v363 = vmul.f32 %v331, %v331
        %v364 = vmul.f32 %v332, %v332
        %v365 = vmul.f32 %v333, %v333
        %v366 = vmul.f32 %v334, %v334
        %v367 = vadd.f32 %v335, %v337
        %v368 = vadd.f32 %v367, %v339
        %v369 = vadd.f32 %v368, %v341
        %v370 = vadd.f32 %v369, %v343
        %v371 = vadd.f32 %v370, %v345
        %v372 = vadd.f32 %v371, %v347
        %v373 = vadd.f32 %v372, %v349
        %v374 = vadd.f32 %v373, %v351
        %v375 = vadd.f32 %v374, %v353
        %v376 = vadd.f32 %v375, %v355
        %v377 = vadd.f32 %v376, %v357
        %v378 = vadd.f32 %v377, %v359
        %v379 = vadd.f32 %v378, %v361
        %v380 = vadd.f32 %v379, %v363
        %v381 = vadd.f32 %v380, %v365
        %v382 = vrot.slane %v381, 4
        %v383 = vadd.f32 %v381, %v382
        %v384 = vrot.slane %v383, 2
        %v385 = vadd.f32 %v383, %v384
        %v386 = vrot.slane %v385, 1
        %v387 = vadd.f32 %v385, %v386
        %v388 = vadd.f32 %v336, %v338
        %v389 = vadd.f32 %v388, %v340
        %v390 = vadd.f32 %v389, %v342
        %v391 = vadd.f32 %v390, %v344
        %v392 = vadd.f32 %v391, %v346
        %v393 = vadd.f32 %v392, %v348
        %v394 = vadd.f32 %v393, %v350
        %v395 = vadd.f32 %v394, %v352
        %v396 = vadd.f32 %v395, %v354
        %v397 = vadd.f32 %v396, %v356
        %v398 = vadd.f32 %v397, %v358
        %v399 = vadd.f32 %v398, %v360
        %v400 = vadd.f32 %v399, %v362
        %v401 = vadd.f32 %v400, %v364
        %v402 = vadd.f32 %v401, %v366
        %v403 = vrot.slane %v402, 4
        %v404 = vadd.f32 %v402, %v403
        %v405 = vrot.slane %v404, 2
        %v406 = vadd.f32 %v404, %v405
        %v407 = vrot.slane %v406, 1
        %v408 = vadd.f32 %v406, %v407
        %v409 = vrsqrt.pop %v387
        %v410 = vmul.f32 %v409, %v387
        %v411 = vmul.f32 %v410, %v409
        %v412 = vmul.f32 0.5, %v411
        %v413 = vsub.f32 1.5, %v412
        %v414 = vmul.f32 %v409, %v413
        %v415 = vmul.f32 %v387, %v414
        %vm416 = vcmp.eq.f32.partialorder %v387, inf
        %v417 = vsel %vm416, %v387, %v415
        %vm418 = vcmp.eq.f32.partialorder %v387, 0.0
        %v419 = vand.u32 %v387, 2147483648
        %v420 = vsel %vm418, %v419, %v417
        %v421 = vrsqrt.pop %v408
        %v422 = vmul.f32 %v421, %v408
        %v423 = vmul.f32 %v422, %v421
        %v424 = vmul.f32 0.5, %v423
        %v425 = vsub.f32 1.5, %v424
        %v426 = vmul.f32 %v421, %v425
        %v427 = vmul.f32 %v408, %v426
        %vm428 = vcmp.eq.f32.partialorder %v408, inf
        %v429 = vsel %vm428, %v408, %v427
        %vm430 = vcmp.eq.f32.partialorder %v408, 0.0
        %v431 = vand.u32 %v408, 2147483648
        %v432 = vsel %vm430, %v431, %v429
        %v433 = vmax.f32 %v420, 1e-12
        %v434 = vmax.f32 %v432, 1e-12
        %v435 = vrcp.pop %v433
        %v436 = vmul.f32 %v433, %v435
        %v437 = vsub.f32 1.0, %v436
        %v438 = vmul.f32 %v435, %v437
        %v439 = vadd.f32 %v435, %v438
        %vm440 = vweird.f32 %v433
        %vm441 = vweird.f32 %v435
        %vm442 = vmor %vm440, %vm441
        %v443 = vsel %vm442, %v435, %v439
        %v444 = vand.u32 2147483647, %v433
        %vm445 = vcmp.eq.f32.partialorder %v444, 8.507059e+37
        %v446 = vand.u32 %v433, 2147483648
        %v447 = vor.u32 1.1754944e-38, %v446
        %v448 = vsel %vm445, %v447, %v443
        %v449 = vmul.f32 1.0, %v448
        %v450 = vrcp.pop %v434
        %v451 = vmul.f32 %v434, %v450
        %v452 = vsub.f32 1.0, %v451
        %v453 = vmul.f32 %v450, %v452
        %v454 = vadd.f32 %v450, %v453
        %vm455 = vweird.f32 %v434
        %vm456 = vweird.f32 %v450
        %vm457 = vmor %vm455, %vm456
        %v458 = vsel %vm457, %v450, %v454
        %v459 = vand.u32 2147483647, %v434
        %vm460 = vcmp.eq.f32.partialorder %v459, 8.507059e+37
        %v461 = vand.u32 %v434, 2147483648
        %v462 = vor.u32 1.1754944e-38, %v461
        %v463 = vsel %vm460, %v462, %v458
        %v464 = vmul.f32 1.0, %v463
        %465 = vmatpush.msra.mxu0 %v333
        %466 = vmatpush.msra.mxu0 %v331
        %467 = vmatpush.msra.mxu0 %v329
        %468 = vmatpush.msra.mxu0 %v327
        %469 = vmatpush.msra.mxu0 %v325
        %470 = vmatpush.msra.mxu0 %v323
        %471 = vmatpush.msra.mxu0 %v321
        %472 = vmatpush.msra.mxu0 %v319
        %473 = vmatpush.msra.mxu0 %v317
        %474 = vmatpush.msra.mxu0 %v315
        %475 = vmatpush.msra.mxu0 %v313
        %476 = vmatpush.msra.mxu0 %v311
        %477 = vmatpush.msra.mxu0 %v309
        %478 = vmatpush.msra.mxu0 %v307
        %479 = vmatpush.msra.mxu0 %v305
        %480 = vmatpush.msra.mxu0 %v303
        %481 = vmatmul.f32.gmra.mxu0 %v301
        %v482 = vpop.f32.mrf.mxu0
        %v483 = vadd.f32 0.0, %v482
        %484 = vmatmul.f32.gmra.mxu0 %v302
        %v485 = vpop.f32.mrf.mxu0
        %v486 = vadd.f32 0.0, %v485
        %487 = vdwg.mxu0
        %488 = vmatpush.msra.mxu0 %v334
        %489 = vmatpush.msra.mxu0 %v332
        %490 = vmatpush.msra.mxu0 %v330
        %491 = vmatpush.msra.mxu0 %v328
        %492 = vmatpush.msra.mxu0 %v326
        %493 = vmatpush.msra.mxu0 %v324
        %494 = vmatpush.msra.mxu0 %v322
        %495 = vmatpush.msra.mxu0 %v320
        %496 = vmatpush.msra.mxu0 %v318
        %497 = vmatpush.msra.mxu0 %v316
        %498 = vmatpush.msra.mxu0 %v314
        %499 = vmatpush.msra.mxu0 %v312
        %500 = vmatpush.msra.mxu0 %v310
        %501 = vmatpush.msra.mxu0 %v308
        %502 = vmatpush.msra.mxu0 %v306
        %503 = vmatpush.msra.mxu0 %v304
        %504 = vmatmul.f32.gmra.mxu0 %v301
        %v505 = vpop.f32.mrf.mxu0
        %v506 = vadd.f32 0.0, %v505
        %507 = vmatmul.f32.gmra.mxu0 %v302
        %v508 = vpop.f32.mrf.mxu0
        %v509 = vadd.f32 0.0, %v508
        %510 = vdwg.mxu0
        %v511 = vld [vmem:[%s291] sm:$0xff]
        %v512 = vld [vmem:[%s291 + $0x8] sm:$0xff]
        %v513 = vmul.f32 %v511, 64.0
        %v514 = vmul.f32 %v512, 64.0
        %516 = vset.pattern.permute.xlu0 0
        %517 = vperm.xlu0 %516, %v513
        %v518 = vpop.permute.xlu0 %517
        %521 = vset.pattern.permute.xlu0 0
        %522 = vperm.xlu0 %521, %v514
        %v523 = vpop.permute.xlu0 %522
        %v525 = vmul.f32 %v483, %v518
        %v526 = vmul.f32 %v506, %v518
        %v527 = vmul.f32 %v486, %v523
        %v528 = vmul.f32 %v509, %v523
        %v529 = vmul.f32 %v525, %v449
        %v530 = vmul.f32 %v526, %v464
        %v531 = vmul.f32 %v527, %v449
        %v532 = vmul.f32 %v528, %v464
        %v533 = vld [vmem:[%s297] sm:$0xff]
        %v534 = vld [vmem:[%s297 + $0x8] sm:$0xff]
        %s535 = smul.u32 %s25, 256
        %v536 = vstv %s535
        %v537 = vsub.s32 %v533, %v536
        %v538 = vsub.s32 %v534, %v536
        %v539 = vlaneseq
        %v540 = vand.u32 %v539, 127
        %v541 = vadd.s32 %v540, 128
        %542 = vset.pattern.permute.xlu0 0
        %543 = vperm.xlu0 %542, %v537
        %v544 = vpop.permute.xlu0 %543
        %545 = vset.pattern.permute.xlu0 0
        %546 = vperm.xlu0 %545, %v538
        %v547 = vpop.permute.xlu0 %546
        %vm548 = vcmp.eq.s32.totalorder %v540, %v544
        %vm549 = vcmp.eq.s32.totalorder %v541, %v544
        %vm550 = vcmp.eq.s32.totalorder %v540, %v547
        %vm551 = vcmp.eq.s32.totalorder %v541, %v547
        %v552 = vsel %vm548, 22.4, 0.0
        %v553 = vsel %vm549, 22.4, 0.0
        %v554 = vsel %vm550, 22.4, 0.0
        %v555 = vsel %vm551, 22.4, 0.0
        %v556 = vsub.f32 %v529, %v552
        %v557 = vsub.f32 %v530, %v553
        %v558 = vsub.f32 %v531, %v554
        %v559 = vsub.f32 %v532, %v555
        %560 = vst [vmem:[%s279] sm:$0xff] %v556
        %561 = vst [vmem:[%s279 + $0x8] sm:$0xff] %v557
        %562 = vst [vmem:[%s279 + $0x10] sm:$0xff] %v558
        %563 = vst [vmem:[%s279 + $0x18] sm:$0xff] %v559
        %s564 = sand.u32 %s147, 1
        %s565 = scalar_lea.sflag [#allocation4], %s564
        %s566 = sand.u32 %s147, 1
        %s567 = smul.addr %s566, 32
        %s568 = scalar_lea.vmem [#allocation5], %s567
        // Predicated region
        $region41: #{tpu_custom_call.1} parent=35 // pred_check
          %p569 = pneg %p157
        $region42: #{tpu_custom_call.1} parent=35 // pred_check_branch
          %571 = sbr.rel (%p569) target = $region44
        $region43: #{tpu_custom_call.1} parent=35 // pred_region
          %s572 = smul.u32 2, %s26
          %s573 = smul.u32 2, %s25
          %575 = vsyncadd %s565, 0
          %s576 = smul.addr %s572, 4
          %s577 = sadd.s32 %s573, %s576
          %s578 = smul.addr %s577, 8
          %s579 = scalar_lea.hbm %s4, %s578
          %s580 = sshll.u32 %s568, 4
          %s581 = int_to_ptr.vmem [resolvable:$true] %s580
          %s582 = sshll.u32 %s579, 4
          %s583 = int_to_ptr.hbm [resolvable:$true] %s582
          %588 = dma.vmem_to_hbm [thread:$0]  %s581, 512, %s583, %s565, 256, 512, 16
        $region44: #{tpu_custom_call.1} parent=35 // pred_fallthru
          _
      $region36: #{tpu_custom_call.1} parent=5 // pred_fallthru
        _
      %p589 = scmp.le.s32.totalorder 2, %s16
      // Predicated region
      $region45: #{tpu_custom_call.1} parent=5 // pred_check
        %p590 = pneg %p589
      $region46: #{tpu_custom_call.1} parent=5 // pred_check_branch
        %592 = sbr.rel (%p590) target = $region48
      $region47: #{tpu_custom_call.1} parent=5 // pred_region
        %s593 = ssub.s32 %s16, 2
        // Predicated region
        $region49: #{tpu_custom_call.1} parent=47 // pred_check
          %p594 = pneg %p163
        $region50: #{tpu_custom_call.1} parent=47 // pred_check_branch
          %596 = sbr.rel (%p594) target = $region52
        $region51: #{tpu_custom_call.1} parent=47 // pred_region
          %s597 = sand.u32 %s148, 1
          %s598 = scalar_lea.sflag [#allocation4], %s597
          %s599 = sand.u32 %s148, 1
          %s600 = smul.addr %s599, 32
          %s601 = scalar_lea.vmem [#allocation5], %s600
          %603 = dma.done %s598, 512
        $region52: #{tpu_custom_call.1} parent=47 // pred_fallthru
          _
      $region48: #{tpu_custom_call.1} parent=5 // pred_fallthru
        _
    $region6: #{tpu_custom_call.1} parent=1 // loop_footer
      %s20 = sadd.s32 1, %s16
    $region7: #{tpu_custom_call.1} parent=1 // loop_footer_branch
      %15 = sbr.rel target = $region3
    $region8: #{tpu_custom_call.1} parent=1 // loop_exit
      _
    %604 = vsyncpa [#allocation3], 1
    %s605 = scalar_lea.sflag [#allocation3], 1
    %606 = vsyncpa %s605, 1
    %607 = vsyncpa [#allocation4], 1
    %s608 = scalar_lea.sflag [#allocation4], 1
    %609 = vsyncpa %s608, 1

</llo_original>
